<compile_context>
chip_gen: v7x
topology: tpu7x:2x2x1
jax: 0.10.0
libtpu: 0.0.40
codegen_flags: <defaults>
</compile_context>

<pallas_src>
import functools

import jax
import jax.numpy as jnp
from jax.experimental import pallas as pl
from jax.experimental.pallas import tpu as pltpu


def _round_up(x, m):
    return (x + m - 1) // m * m


def _fold_lanes(x, op, width):
    """Fold the lane (last) dim of a [t, T] value into [t, width] with `op`.

    T is a compile-time multiple of `width`, and the slices are 128-lane
    aligned when width == 128, so this is pure VALU work (no XLU traffic).
    """
    t_cols = x.shape[1]
    acc = x[:, :width]
    for g in range(1, t_cols // width):
        acc = op(acc, x[:, g * width:(g + 1) * width])
    return acc


def _supcon_kernel(fq_ref, fk_ref, lq_ref, lk_ref, out_ref,
                   m_sc, z_sc, s_sc, p_sc,
                   *, inv_temperature, b_real, block, acc_w, has_pad,
                   k_resident):
    qi = pl.program_id(0)
    ki = pl.program_id(1)

    # ---- init per-row accumulators at the start of each kv sweep ----
    @pl.when(ki == 0)
    def _():
        m_sc[...] = jnp.full_like(m_sc, -jnp.inf)   # running row max of adc
        z_sc[...] = jnp.zeros_like(z_sc)            # lane-wise sum exp(adc - m), off-diag
        s_sc[...] = jnp.zeros_like(s_sc)            # lane-wise sum mask * adc
        p_sc[...] = jnp.zeros_like(p_sc)            # lane-wise positive count

    # ---- K-side tile: streamed per grid step, or sliced from resident K ----
    if k_resident:
        k0 = pl.multiple_of(ki * block, block)
        fk = fk_ref[pl.ds(k0, block), :]
        lk = lk_ref[pl.ds(k0, block), :]
    else:
        fk = fk_ref[...]
        lk = lk_ref[...]

    # ---- gram tiles: contract dim 1 of BOTH operands (no transpose) ----
    adc = jax.lax.dot_general(
        fq_ref[...], fk,
        dimension_numbers=(((1,), (1,)), ((), ())),
        preferred_element_type=jnp.float32) * inv_temperature       # [t, t] f32

    lsim = jax.lax.dot_general(
        lq_ref[...], lk,
        dimension_numbers=(((1,), (1,)), ((), ())),
        preferred_element_type=jnp.float32)                         # [t, t] f32

    row = qi * block + jax.lax.broadcasted_iota(jnp.int32, adc.shape, 0)
    col = ki * block + jax.lax.broadcasted_iota(jnp.int32, adc.shape, 1)
    off_diag = row != col

    if has_pad:
        # padded columns must never win the max nor enter the denominator
        adc_v = jnp.where(col < b_real, adc, jnp.float32(-1e30))
    else:
        adc_v = adc

    # ---- online row max: VALU lane-group fold, then ONE small XLU reduce ----
    m_prev = m_sc[...]
    m_fold = _fold_lanes(adc_v, jnp.maximum, acc_w)                 # [t, acc_w]
    m_new = jnp.maximum(m_prev, jnp.max(m_fold, axis=1, keepdims=True))

    # ---- lane-wise accumulators (cross-lane sums deferred to the finalize) ----
    e = jnp.where(off_diag, jnp.exp(adc_v - m_new), 0.0)
    z_sc[...] = z_sc[...] * jnp.exp(m_prev - m_new) + _fold_lanes(e, jnp.add, acc_w)
    m_sc[...] = m_new

    # positives: shared label & off-diagonal (padded label cols give lsim == 0)
    pos = (lsim > 0.0) & off_diag
    s_sc[...] += _fold_lanes(jnp.where(pos, adc, 0.0), jnp.add, acc_w)
    p_sc[...] += _fold_lanes(jnp.where(pos, 1.0, 0.0), jnp.add, acc_w)

    # ---- finalize per-row mean_log_prob_pos on the last kv step ----
    @pl.when(ki == pl.num_programs(1) - 1)
    def _():
        z = jnp.sum(z_sc[...], axis=1, keepdims=True)   # one XLU reduce / q block
        s = jnp.sum(s_sc[...], axis=1, keepdims=True)
        p = jnp.sum(p_sc[...], axis=1, keepdims=True)
        num = s - p * (m_sc[...] + jnp.log(z + 1e-12))
        out_ref[...] = num / (p + 1e-12)


def supcon_loss_multilabel(features, multi_hot_labels, temperature=0.07,
                           *, block_size=512, compute_dtype=jnp.bfloat16,
                           k_resident="auto"):
    """Pallas TPU implementation of SupConLossMultiLabel.forward.

    compute_dtype: MXU input dtype for the two gram matmuls (f32 accumulation
    always).  bf16 (default) gives ~3x MXU throughput and halves tile DMA
    bytes; pass jnp.float32 for bit-faithful logits.  0/1 labels stay exact
    in either dtype.
    """
    features = jnp.asarray(features)
    multi_hot_labels = jnp.asarray(multi_hot_labels)
    B, D = features.shape
    Bl, C = multi_hot_labels.shape
    assert B == Bl, "features and multi_hot_labels must share the batch dim"

    compute_dtype = jnp.dtype(compute_dtype)
    isz = compute_dtype.itemsize
    d_pad = _round_up(D, 128)
    c_pad = _round_up(C, 128)

    # ---- row-tile selection: default 512, capped for very wide (D+C) rows ----
    bs = int(block_size)
    if bs >= 128 and (d_pad + c_pad) * isz > 8192:
        bs = 256
    b8 = _round_up(B, 8)
    if bs < 128:
        block = _round_up(min(bs, b8), 8)           # explicit small tiles
    elif b8 <= 128:
        block = b8                                  # single small q block
    else:
        block = min(_round_up(b8, 128), _round_up(bs, 128))
    b_pad = _round_up(B, block)
    nq = b_pad // block
    nk = b_pad // block
    acc_w = min(block, 128)                         # lane width of accumulators
    has_pad = b_pad > B

    # ---- generation-aware scoped-VMEM budget (48 MiB is v7x-safe) ----
    vmem_limit = 48 * 1024 * 1024
    try:
        cap = getattr(pltpu.get_tpu_info(), "vmem_capacity_bytes", None)
        if cap is not None and cap >= 100 * 1024 * 1024:
            vmem_limit = 96 * 1024 * 1024           # v5e / v6e: 128 MiB physical
    except Exception:
        pass

    # ---- decide whether the full K side can stay resident in VMEM ----
    q_bytes = 2 * 2 * block * (d_pad + c_pad) * isz        # fq+lq, double buffered
    tmp_bytes = 8 * block * block * 4                      # live [t,t] f32 temps
    acc_bytes = (3 * acc_w + 128) * block * 4              # z/s/p + m scratch
    out_bytes = 2 * block * 128 * 4
    k_res_bytes = 2 * 2 * b_pad * (d_pad + c_pad) * isz    # fk+lk full, 2 buffers
    if k_resident == "auto":
        k_resident = (q_bytes + tmp_bytes + acc_bytes + out_bytes +
                      k_res_bytes) <= int(0.7 * vmem_limit)
    k_resident = bool(k_resident)

    # lane/sublane friendly zero padding; 0/1 labels are exact in bf16.
    f = jnp.pad(features.astype(jnp.float32),
                ((0, b_pad - B), (0, d_pad - D))).astype(compute_dtype)
    lab = jnp.pad(multi_hot_labels.astype(jnp.float32),
                  ((0, b_pad - B), (0, c_pad - C))).astype(compute_dtype)

    kernel = functools.partial(
        _supcon_kernel,
        inv_temperature=float(1.0 / float(temperature)),
        b_real=int(B), block=int(block), acc_w=int(acc_w),
        has_pad=bool(has_pad), k_resident=k_resident)

    if k_resident:
        fk_spec = pl.BlockSpec((b_pad, d_pad), lambda qi, ki: (0, 0))
        lk_spec = pl.BlockSpec((b_pad, c_pad), lambda qi, ki: (0, 0))
        k_stream_bytes = b_pad * (d_pad + c_pad) * isz
    else:
        fk_spec = pl.BlockSpec((block, d_pad), lambda qi, ki: (ki, 0))
        lk_spec = pl.BlockSpec((block, c_pad), lambda qi, ki: (ki, 0))
        k_stream_bytes = nq * b_pad * (d_pad + c_pad) * isz

    cost = pl.CostEstimate(
        flops=int(2 * b_pad * b_pad * (d_pad + c_pad)),
        transcendentals=int(b_pad * b_pad),
        bytes_accessed=int(b_pad * (d_pad + c_pad) * isz + k_stream_bytes + b_pad * 4),
    )

    mlpp = pl.pallas_call(
        kernel,
        out_shape=jax.ShapeDtypeStruct((b_pad, 1), jnp.float32),
        grid_spec=pltpu.PrefetchScalarGridSpec(
            num_scalar_prefetch=0,
            grid=(nq, nk),
            in_specs=[
                pl.BlockSpec((block, d_pad), lambda qi, ki: (qi, 0)),  # Q features
                fk_spec,                                               # K features
                pl.BlockSpec((block, c_pad), lambda qi, ki: (qi, 0)),  # Q labels
                lk_spec,                                               # K labels
            ],
            out_specs=pl.BlockSpec((block, 1), lambda qi, ki: (qi, 0)),
            scratch_shapes=[
                pltpu.VMEM((block, 1), jnp.float32),       # m: running row max
                pltpu.VMEM((block, acc_w), jnp.float32),   # z: lane-wise denom partials
                pltpu.VMEM((block, acc_w), jnp.float32),   # s: lane-wise sum(mask*adc)
                pltpu.VMEM((block, acc_w), jnp.float32),   # p: lane-wise mask count
            ],
        ),
        compiler_params=pltpu.CompilerParams(
            dimension_semantics=("parallel", "arbitrary"),
            vmem_limit_bytes=int(vmem_limit),
        ),
        cost_estimate=cost,
    )(f, f, lab, lab)

    # tiny final reduction over the B real rows (padded rows contribute 0 and
    # are sliced off anyway)
    return -jnp.sum(mlpp[:B, 0]) / B


def _reference(features, multi_hot_labels, temperature=0.07):
    # Pure-JAX reference mirroring the PyTorch module, for correctness checks.
    labels = multi_hot_labels.astype(jnp.float32)
    f = features.astype(jnp.float32)
    B = f.shape[0]
    label_sim = labels @ labels.T
    mask = (label_sim > 0).astype(jnp.float32)
    adc = (f @ f.T) / temperature
    logits = adc - jnp.max(adc, axis=1, keepdims=True)
    logits_mask = jnp.ones((B, B), jnp.float32) - jnp.eye(B, dtype=jnp.float32)
    mask = mask * logits_mask
    exp_logits = jnp.exp(logits) * logits_mask
    log_prob = logits - jnp.log(exp_logits.sum(1, keepdims=True) + 1e-12)
    mask_sum = mask.sum(1)
    mean_log_prob_pos = (mask * log_prob).sum(1) / (mask_sum + 1e-12)
    return -mean_log_prob_pos.mean()


if __name__ == "__main__":
    def make_inputs(key, B, D, C):
        kf, kl = jax.random.split(key)
        f = jax.random.normal(kf, (B, D), dtype=jnp.float32)
        f = f / jnp.linalg.norm(f, axis=1, keepdims=True)
        l = jax.random.bernoulli(kl, p=0.4, shape=(B, C)).astype(jnp.float32)
        return f, l

    # 1) tiny single-tile, f32 MXU path, resident K: tight check.
    f1, l1 = make_inputs(jax.random.PRNGKey(0), 8, 32, 6)
    ref1 = _reference(f1, l1, temperature=0.07)
    out1 = jax.block_until_ready(
        supcon_loss_multilabel(f1, l1, temperature=0.07, compute_dtype=jnp.float32))
    assert jnp.allclose(out1, ref1, rtol=1e-4, atol=1e-4), (out1, ref1)

    # 2) default bf16 MXU inputs (f32 accumulation, f32 softmax math): loose check.
    out2 = jax.block_until_ready(
        supcon_loss_multilabel(f1, l1, temperature=0.07))
    assert jnp.allclose(out2, ref1, rtol=2e-2, atol=2e-2), (out2, ref1)

    # 3) multi-tile streamed-K grid with batch padding: B=20 -> 3x3 grid of
    #    8-row tiles, last kv block column-masked.
    f3, l3 = make_inputs(jax.random.PRNGKey(1), 20, 32, 6)
    ref3 = _reference(f3, l3, temperature=0.07)
    out3 = jax.block_until_ready(
        supcon_loss_multilabel(f3, l3, temperature=0.07, block_size=8,
                               compute_dtype=jnp.float32, k_resident=False))
    assert jnp.allclose(out3, ref3, rtol=1e-4, atol=1e-4), (out3, ref3)

    # 4) lane-group fold path (block=256 > 128, 2 lane groups) with row/column
    #    padding: B=200 padded to 256.
    f4, l4 = make_inputs(jax.random.PRNGKey(2), 200, 64, 10)
    ref4 = _reference(f4, l4, temperature=0.07)
    out4 = jax.block_until_ready(
        supcon_loss_multilabel(f4, l4, temperature=0.07, compute_dtype=jnp.float32))
    assert jnp.allclose(out4, ref4, rtol=5e-3, atol=5e-3), (out4, ref4)

    print("KERNEL_OK")
</pallas_src>

<mosaic_0001>
module attributes {stable_mosaic.version = 11 : i64} {
  func.func @_supcon_kernel(%arg0: i32, %arg1: i32, %arg2: memref<8x128xf32, #tpu.memory_space<vmem>>, %arg3: memref<8x128xf32, #tpu.memory_space<vmem>>, %arg4: memref<8x128xf32, #tpu.memory_space<vmem>>, %arg5: memref<8x128xf32, #tpu.memory_space<vmem>>, %arg6: memref<8x1xf32, #tpu.memory_space<vmem>>, %arg7: memref<8x1xf32, #tpu.memory_space<vmem>>, %arg8: memref<8x8xf32, #tpu.memory_space<vmem>>, %arg9: memref<8x8xf32, #tpu.memory_space<vmem>>, %arg10: memref<8x8xf32, #tpu.memory_space<vmem>>) attributes {dimension_semantics = [#tpu.dimension_semantics<parallel>, #tpu.dimension_semantics<arbitrary>], iteration_bounds = array<i64: 1, 1>, scalar_prefetch = 0 : i64, scratch_operands = 4 : i64, tpu.core_type = #tpu.core_type<tc>, window_params = [{transform_indices = @transform_0, window_bounds = array<i64: 8, 128>}, {pipeline_mode = #tpu.pipeline_mode<synchronous>, transform_indices = @transform_1, window_bounds = array<i64: 8, 128>}, {transform_indices = @transform_2, window_bounds = array<i64: 8, 128>}, {pipeline_mode = #tpu.pipeline_mode<synchronous>, transform_indices = @transform_3, window_bounds = array<i64: 8, 128>}, {transform_indices = @transform_4, window_bounds = array<i64: 8, 1>}]} {
    %c0_i32 = arith.constant 0 : i32
    %0 = arith.cmpi eq, %arg1, %c0_i32 : i32
    %1 = arith.extui %0 : i1 to i32
    %c0_i32_0 = arith.constant 0 : i32
    %2 = arith.cmpi ne, %1, %c0_i32_0 : i32
    scf.if %2 {
      %cst_34 = arith.constant 0xFF800000 : f32
      %58 = vector.broadcast %cst_34 : f32 to vector<8x1xf32>
      %c0_35 = arith.constant 0 : index
      %c0_36 = arith.constant 0 : index
      %59 = vector.load %arg7[%c0_35, %c0_36] : memref<8x1xf32, #tpu.memory_space<vmem>>, vector<8x1xf32>
      tpu.vector_store %arg7[%c0_35, %c0_36], %58 {strides = array<i32>} : memref<8x1xf32, #tpu.memory_space<vmem>>, vector<8x1xf32>,
      %cst_37 = arith.constant 0.000000e+00 : f32
      %60 = vector.broadcast %cst_37 : f32 to vector<8x8xf32>
      %c0_38 = arith.constant 0 : index
      %c0_39 = arith.constant 0 : index
      %61 = vector.load %arg8[%c0_38, %c0_39] : memref<8x8xf32, #tpu.memory_space<vmem>>, vector<8x8xf32>
      tpu.vector_store %arg8[%c0_38, %c0_39], %60 {strides = array<i32>} : memref<8x8xf32, #tpu.memory_space<vmem>>, vector<8x8xf32>,
      %cst_40 = arith.constant 0.000000e+00 : f32
      %62 = vector.broadcast %cst_40 : f32 to vector<8x8xf32>
      %c0_41 = arith.constant 0 : index
      %c0_42 = arith.constant 0 : index
      %63 = vector.load %arg9[%c0_41, %c0_42] : memref<8x8xf32, #tpu.memory_space<vmem>>, vector<8x8xf32>
      tpu.vector_store %arg9[%c0_41, %c0_42], %62 {strides = array<i32>} : memref<8x8xf32, #tpu.memory_space<vmem>>, vector<8x8xf32>,
      %cst_43 = arith.constant 0.000000e+00 : f32
      %64 = vector.broadcast %cst_43 : f32 to vector<8x8xf32>
      %c0_44 = arith.constant 0 : index
      %c0_45 = arith.constant 0 : index
      %65 = vector.load %arg10[%c0_44, %c0_45] : memref<8x8xf32, #tpu.memory_space<vmem>>, vector<8x8xf32>
      tpu.vector_store %arg10[%c0_44, %c0_45], %64 {strides = array<i32>} : memref<8x8xf32, #tpu.memory_space<vmem>>, vector<8x8xf32>,
    } else {
    }
    %c8_i32 = arith.constant 8 : i32
    %3 = arith.muli %arg1, %c8_i32 : i32
    %4 = tpu.assume_multiple %3, 8 : i32
    %5 = arith.index_cast %4 : i32 to index
    %c0 = arith.constant 0 : index
    %6 = vector.load %arg3[%5, %c0] : memref<8x128xf32, #tpu.memory_space<vmem>>, vector<8x128xf32>
    %7 = arith.index_cast %4 : i32 to index
    %c0_1 = arith.constant 0 : index
    %8 = vector.load %arg5[%7, %c0_1] : memref<8x128xf32, #tpu.memory_space<vmem>>, vector<8x128xf32>
    %c0_2 = arith.constant 0 : index
    %c0_3 = arith.constant 0 : index
    %9 = vector.load %arg2[%c0_2, %c0_3] : memref<8x128xf32, #tpu.memory_space<vmem>>, vector<8x128xf32>
    %cst = arith.constant dense<0.000000e+00> : vector<8x8xf32>
    %10 = tpu.matmul %9, %6, %cst {dimension_numbers = #tpu.dot_dimension_numbers<[1], [1], [0], [0], [0, 0, 1, 0], [], []>} : vector<8x128xf32>, vector<8x128xf32>, vector<8x8xf32> -> vector<8x8xf32>
    %cst_4 = arith.constant 14.2857141 : f32
    %11 = vector.broadcast %cst_4 : f32 to vector<8x8xf32>
    %12 = arith.mulf %10, %11 : vector<8x8xf32>
    %c0_5 = arith.constant 0 : index
    %c0_6 = arith.constant 0 : index
    %13 = vector.load %arg4[%c0_5, %c0_6] : memref<8x128xf32, #tpu.memory_space<vmem>>, vector<8x128xf32>
    %cst_7 = arith.constant dense<0.000000e+00> : vector<8x8xf32>
    %14 = tpu.matmul %13, %8, %cst_7 {dimension_numbers = #tpu.dot_dimension_numbers<[1], [1], [0], [0], [0, 0, 1, 0], [], []>} : vector<8x128xf32>, vector<8x128xf32>, vector<8x8xf32> -> vector<8x8xf32>
    %c8_i32_8 = arith.constant 8 : i32
    %15 = arith.muli %arg0, %c8_i32_8 : i32
    %16 = tpu.iota {dimensions = array<i32: 0>} : vector<8x8xi32>
    %17 = vector.broadcast %15 : i32 to vector<8x8xi32>
    %18 = arith.addi %17, %16 : vector<8x8xi32>
    %c8_i32_9 = arith.constant 8 : i32
    %19 = arith.muli %arg1, %c8_i32_9 : i32
    %20 = tpu.iota {dimensions = array<i32: 1>} : vector<8x8xi32>
    %21 = vector.broadcast %19 : i32 to vector<8x8xi32>
    %22 = arith.addi %21, %20 : vector<8x8xi32>
    %23 = arith.cmpi ne, %18, %22 : vector<8x8xi32>
    %c0_10 = arith.constant 0 : index
    %c0_11 = arith.constant 0 : index
    %24 = vector.load %arg7[%c0_10, %c0_11] : memref<8x1xf32, #tpu.memory_space<vmem>>, vector<8x1xf32>
    %cst_12 = arith.constant dense<0xFF800000> : vector<8xf32>
    %25 = vector.multi_reduction <maximumf>, %12, %cst_12 [1] : vector<8x8xf32> to vector<8xf32>
    %26 = vector.shape_cast %25 : vector<8xf32> to vector<8x1xf32>
    %27 = arith.maximumf %24, %26 : vector<8x1xf32>
    %28 = vector.broadcast %27 : vector<8x1xf32> to vector<8x8xf32>
    %29 = arith.subf %12, %28 : vector<8x8xf32>
    %30 = math.exp %29 : vector<8x8xf32>
    %cst_13 = arith.constant 0.000000e+00 : f32
    %31 = vector.broadcast %cst_13 : f32 to vector<8x8xf32>
    %32 = arith.select %23, %30, %31 : vector<8x8xi1>, vector<8x8xf32>
    %c0_14 = arith.constant 0 : index
    %c0_15 = arith.constant 0 : index
    %33 = vector.load %arg8[%c0_14, %c0_15] : memref<8x8xf32, #tpu.memory_space<vmem>>, vector<8x8xf32>
    %34 = arith.subf %24, %27 : vector<8x1xf32>
    %35 = math.exp %34 : vector<8x1xf32>
    %36 = vector.broadcast %35 : vector<8x1xf32> to vector<8x8xf32>
    %37 = arith.mulf %33, %36 : vector<8x8xf32>
    %38 = arith.addf %37, %32 : vector<8x8xf32>
    %c0_16 = arith.constant 0 : index
    %c0_17 = arith.constant 0 : index
    %39 = vector.load %arg8[%c0_16, %c0_17] : memref<8x8xf32, #tpu.memory_space<vmem>>, vector<8x8xf32>
    tpu.vector_store %arg8[%c0_16, %c0_17], %38 {strides = array<i32>} : memref<8x8xf32, #tpu.memory_space<vmem>>, vector<8x8xf32>,
    %c0_18 = arith.constant 0 : index
    %c0_19 = arith.constant 0 : index
    %40 = vector.load %arg7[%c0_18, %c0_19] : memref<8x1xf32, #tpu.memory_space<vmem>>, vector<8x1xf32>
    tpu.vector_store %arg7[%c0_18, %c0_19], %27 {strides = array<i32>} : memref<8x1xf32, #tpu.memory_space<vmem>>, vector<8x1xf32>,
    %cst_20 = arith.constant 0.000000e+00 : f32
    %41 = vector.broadcast %cst_20 : f32 to vector<8x8xf32>
    %42 = arith.cmpf ogt, %14, %41 : vector<8x8xf32>
    %43 = arith.andi %42, %23 : vector<8x8xi1>
    %c0_21 = arith.constant 0 : index
    %c0_22 = arith.constant 0 : index
    %44 = vector.load %arg9[%c0_21, %c0_22] : memref<8x8xf32, #tpu.memory_space<vmem>>, vector<8x8xf32>
    %cst_23 = arith.constant 0.000000e+00 : f32
    %45 = vector.broadcast %cst_23 : f32 to vector<8x8xf32>
    %46 = arith.select %43, %12, %45 : vector<8x8xi1>, vector<8x8xf32>
    %47 = arith.addf %44, %46 : vector<8x8xf32>
    %c0_24 = arith.constant 0 : index
    %c0_25 = arith.constant 0 : index
    %48 = vector.load %arg9[%c0_24, %c0_25] : memref<8x8xf32, #tpu.memory_space<vmem>>, vector<8x8xf32>
    tpu.vector_store %arg9[%c0_24, %c0_25], %47 {strides = array<i32>} : memref<8x8xf32, #tpu.memory_space<vmem>>, vector<8x8xf32>,
    %c0_26 = arith.constant 0 : index
    %c0_27 = arith.constant 0 : index
    %49 = vector.load %arg10[%c0_26, %c0_27] : memref<8x8xf32, #tpu.memory_space<vmem>>, vector<8x8xf32>
    %cst_28 = arith.constant 1.000000e+00 : f32
    %cst_29 = arith.constant 0.000000e+00 : f32
    %50 = vector.broadcast %cst_28 : f32 to vector<8x8xf32>
    %51 = vector.broadcast %cst_29 : f32 to vector<8x8xf32>
    %52 = arith.select %43, %50, %51 : vector<8x8xi1>, vector<8x8xf32>
    %53 = arith.addf %49, %52 : vector<8x8xf32>
    %c0_30 = arith.constant 0 : index
    %c0_31 = arith.constant 0 : index
    %54 = vector.load %arg10[%c0_30, %c0_31] : memref<8x8xf32, #tpu.memory_space<vmem>>, vector<8x8xf32>
    tpu.vector_store %arg10[%c0_30, %c0_31], %53 {strides = array<i32>} : memref<8x8xf32, #tpu.memory_space<vmem>>, vector<8x8xf32>,
    %c0_i32_32 = arith.constant 0 : i32
    %55 = arith.cmpi eq, %arg1, %c0_i32_32 : i32
    %56 = arith.extui %55 : i1 to i32
    %c0_i32_33 = arith.constant 0 : i32
    %57 = arith.cmpi ne, %56, %c0_i32_33 : i32
    scf.if %57 {
      %c0_34 = arith.constant 0 : index
      %c0_35 = arith.constant 0 : index
      %58 = vector.load %arg8[%c0_34, %c0_35] : memref<8x8xf32, #tpu.memory_space<vmem>>, vector<8x8xf32>
      %cst_36 = arith.constant dense<0.000000e+00> : vector<8xf32>
      %59 = vector.multi_reduction <add>, %58, %cst_36 [1] : vector<8x8xf32> to vector<8xf32>
      %60 = vector.shape_cast %59 : vector<8xf32> to vector<8x1xf32>
      %c0_37 = arith.constant 0 : index
      %c0_38 = arith.constant 0 : index
      %61 = vector.load %arg9[%c0_37, %c0_38] : memref<8x8xf32, #tpu.memory_space<vmem>>, vector<8x8xf32>
      %cst_39 = arith.constant dense<0.000000e+00> : vector<8xf32>
      %62 = vector.multi_reduction <add>, %61, %cst_39 [1] : vector<8x8xf32> to vector<8xf32>
      %63 = vector.shape_cast %62 : vector<8xf32> to vector<8x1xf32>
      %c0_40 = arith.constant 0 : index
      %c0_41 = arith.constant 0 : index
      %64 = vector.load %arg10[%c0_40, %c0_41] : memref<8x8xf32, #tpu.memory_space<vmem>>, vector<8x8xf32>
      %cst_42 = arith.constant dense<0.000000e+00> : vector<8xf32>
      %65 = vector.multi_reduction <add>, %64, %cst_42 [1] : vector<8x8xf32> to vector<8xf32>
      %66 = vector.shape_cast %65 : vector<8xf32> to vector<8x1xf32>
      %c0_43 = arith.constant 0 : index
      %c0_44 = arith.constant 0 : index
      %67 = vector.load %arg7[%c0_43, %c0_44] : memref<8x1xf32, #tpu.memory_space<vmem>>, vector<8x1xf32>
      %cst_45 = arith.constant 9.99999996E-13 : f32
      %68 = vector.broadcast %cst_45 : f32 to vector<8x1xf32>
      %69 = arith.addf %60, %68 : vector<8x1xf32>
      %70 = math.log %69 : vector<8x1xf32>
      %71 = arith.addf %67, %70 : vector<8x1xf32>
      %72 = arith.mulf %66, %71 : vector<8x1xf32>
      %73 = arith.subf %63, %72 : vector<8x1xf32>
      %cst_46 = arith.constant 9.99999996E-13 : f32
      %74 = vector.broadcast %cst_46 : f32 to vector<8x1xf32>
      %75 = arith.addf %66, %74 : vector<8x1xf32>
      %76 = arith.divf %73, %75 : vector<8x1xf32>
      %c0_47 = arith.constant 0 : index
      %c0_48 = arith.constant 0 : index
      %77 = vector.load %arg6[%c0_47, %c0_48] : memref<8x1xf32, #tpu.memory_space<vmem>>, vector<8x1xf32>
      tpu.vector_store %arg6[%c0_47, %c0_48], %76 {strides = array<i32>} : memref<8x1xf32, #tpu.memory_space<vmem>>, vector<8x1xf32>,
    } else {
    }
    return
  }
  func.func @transform_0(%arg0: i32, %arg1: i32) -> (i32, i32) {
    %c0_i32 = arith.constant 0 : i32
    %c0_i32_0 = arith.constant 0 : i32
    return %arg0, %c0_i32 : i32, i32
  }
  func.func @transform_1(%arg0: i32, %arg1: i32) -> (i32, i32) {
    %c0_i32 = arith.constant 0 : i32
    %c0_i32_0 = arith.constant 0 : i32
    %c0_i32_1 = arith.constant 0 : i32
    return %c0_i32, %c0_i32_0 : i32, i32
  }
  func.func @transform_2(%arg0: i32, %arg1: i32) -> (i32, i32) {
    %c0_i32 = arith.constant 0 : i32
    %c0_i32_0 = arith.constant 0 : i32
    return %arg0, %c0_i32 : i32, i32
  }
  func.func @transform_3(%arg0: i32, %arg1: i32) -> (i32, i32) {
    %c0_i32 = arith.constant 0 : i32
    %c0_i32_0 = arith.constant 0 : i32
    %c0_i32_1 = arith.constant 0 : i32
    return %c0_i32, %c0_i32_0 : i32, i32
  }
  func.func @transform_4(%arg0: i32, %arg1: i32) -> (i32, i32) {
    %c0_i32 = arith.constant 0 : i32
    %c0_i32_0 = arith.constant 0 : i32
    return %arg0, %c0_i32 : i32, i32
  }
}

</mosaic_0001>

<llo_original>
// kernel: tpu_custom_call.1
$region0: #{tpu_custom_call.1}
  #allocation0 [shape = 'u32[]', space=smem, size = 0x4, offset = 0x4, fixed_abs, tag = 'smem constant byte address 0x4 - core index']
  #allocation1 [shape = 'u32[144,128]{1,0:T(1,128)}', space=vmem, size = 0x12000, scoped, tag = 'internal scratch']
  #allocation2 [shape = 'f32[8,1]{1,0:T(8,128)}', space=vmem, size = 0x1000, scoped, tag = 'scratch operand']
  #allocation3 [shape = 'f32[8,8]{1,0:T(8,128)}', space=vmem, size = 0x1000, scoped, tag = 'scratch operand']
  #allocation4 [shape = 'f32[8,8]{1,0:T(8,128)}', space=vmem, size = 0x1000, scoped, tag = 'scratch operand']
  #allocation5 [shape = 'f32[8,8]{1,0:T(8,128)}', space=vmem, size = 0x1000, scoped, tag = 'scratch operand']
  %s0 = inlined_call_operand.hbm [shape: f32[8,128], index: 0, kind: input, shape index: {}]
  %s1 = inlined_call_operand.hbm [shape: f32[8,128], index: 1, kind: input, shape index: {}]
  %s2 = inlined_call_operand.hbm [shape: f32[8,128], index: 2, kind: input, shape index: {}]
  %s3 = inlined_call_operand.vmem [shape: f32[8,128], index: 3, kind: input, shape index: {}]
  %s4 = inlined_call_operand.vmem [shape: f32[8,1], index: 4, kind: output, shape index: {}]
  %s5 = sld [smem:[#allocation0]]
  $region46: #{tpu_custom_call.1} parent=0
    _
  %s7 = ssub.s32 1, %s5
  %s8 = scalar_select 0, %s7, %s5
  $region1: #{tpu_custom_call.1} parent=0
    #allocation6 [shape = 'u8[4096]{0}', space=vmem, size = 0x1000, scoped, tag = 'input window, operand 0, single buffered']
    #allocation7 [shape = 's32[1]{0}', space=sflag, size = 0x4, scoped, tag = 'scoped memory for tpu_custom_call.1']
    #allocation8 [shape = 'u8[4096]{0}', space=vmem, size = 0x1000, scoped, tag = 'input window, operand 1, single buffered']
    #allocation9 [shape = 's32[1]{0}', space=sflag, size = 0x4, scoped, tag = 'scoped memory for tpu_custom_call.1']
    #allocation10 [shape = 'u8[4096]{0}', space=vmem, size = 0x1000, scoped, tag = 'input window, operand 2, single buffered']
    %9 = vsyncpa [#allocation7], 0
    %10 = vsyncpa [#allocation9], 0
    // Predicated region
    $region2: #{tpu_custom_call.1} parent=1 // pred_check
      _
    $region3: #{tpu_custom_call.1} parent=1 // pred_check_branch
      %12 = sbr.rel (0) target = $region5
    $region4: #{tpu_custom_call.1} parent=1 // pred_region
      %s14 = ssub.s32 128, 128
      %15 = vsyncadd [#allocation7], %s14
      %s17 = sshll.u32 [#allocation6], 4
      %s18 = int_to_ptr.vmem [resolvable:$true] %s17
      %20 = dma.hbm_to_vmem [thread:$0]  %s0, 128, %s18, [#allocation7]
    $region5: #{tpu_custom_call.1} parent=1 // pred_fallthru
      _
    // Predicated region
    $region6: #{tpu_custom_call.1} parent=1 // pred_check
      _
    $region7: #{tpu_custom_call.1} parent=1 // pred_check_branch
      %22 = sbr.rel (0) target = $region9
    $region8: #{tpu_custom_call.1} parent=1 // pred_region
      %s24 = ssub.s32 128, 128
      %25 = vsyncadd [#allocation9], %s24
      %s27 = sshll.u32 [#allocation8], 4
      %s28 = int_to_ptr.vmem [resolvable:$true] %s27
      %30 = dma.hbm_to_vmem [thread:$0]  %s1, 128, %s28, [#allocation9]
    $region9: #{tpu_custom_call.1} parent=1 // pred_fallthru
      _
    // Predicated region
    $region10: #{tpu_custom_call.1} parent=1 // pred_check
      _
    $region11: #{tpu_custom_call.1} parent=1 // pred_check_branch
      %32 = sbr.rel (0) target = $region13
    $region12: #{tpu_custom_call.1} parent=1 // pred_region
      %s34 = ssub.s32 128, 128
      %35 = vsyncadd [#allocation9], %s34
      %s37 = sshll.u32 [#allocation10], 4
      %s38 = int_to_ptr.vmem [resolvable:$true] %s37
      %40 = dma.hbm_to_vmem [thread:$0]  %s2, 128, %s38, [#allocation9]
    $region13: #{tpu_custom_call.1} parent=1 // pred_fallthru
      _
    // Predicated region
    $region14: #{tpu_custom_call.1} parent=1 // pred_check
      _
    $region15: #{tpu_custom_call.1} parent=1 // pred_check_branch
      %42 = sbr.rel (0) target = $region17
    $region16: #{tpu_custom_call.1} parent=1 // pred_region
      _
    $region17: #{tpu_custom_call.1} parent=1 // pred_fallthru
      _
    // Predicated region
    $region18: #{tpu_custom_call.1} parent=1 // pred_check
      _
    $region19: #{tpu_custom_call.1} parent=1 // pred_check_branch
      %44 = sbr.rel (0) target = $region21
    $region20: #{tpu_custom_call.1} parent=1 // pred_region
      %45 = dma.done [#allocation7], 128
    $region21: #{tpu_custom_call.1} parent=1 // pred_fallthru
      _
    // Predicated region
    $region22: #{tpu_custom_call.1} parent=1 // pred_check
      _
    $region23: #{tpu_custom_call.1} parent=1 // pred_check_branch
      %47 = sbr.rel (0) target = $region25
    $region24: #{tpu_custom_call.1} parent=1 // pred_region
      %48 = dma.done [#allocation9], 128
    $region25: #{tpu_custom_call.1} parent=1 // pred_fallthru
      _
    // Predicated region
    $region26: #{tpu_custom_call.1} parent=1 // pred_check
      _
    $region27: #{tpu_custom_call.1} parent=1 // pred_check_branch
      %50 = sbr.rel (0) target = $region29
    $region28: #{tpu_custom_call.1} parent=1 // pred_region
      %51 = dma.done [#allocation9], 128
    $region29: #{tpu_custom_call.1} parent=1 // pred_fallthru
      _
    %p52 = scmp.eq.s32.totalorder 0, 0
    // Predicated region
    $region30: #{tpu_custom_call.1} parent=1 // pred_check
      %p53 = pneg %p52
    $region31: #{tpu_custom_call.1} parent=1 // pred_check_branch
      %55 = sbr.rel (%p53) target = $region33
    $region32: #{tpu_custom_call.1} parent=1 // pred_region
      %vm56 = vcmask 7168
      %57 = vst.msk [vmem:[#allocation2] sm:$0xff] %vm56, -inf
      %vm58 = vcmask 64512
      %59 = vst.msk [vmem:[#allocation3] sm:$0xff] %vm58, 0.0
      %60 = vst.msk [vmem:[#allocation4] sm:$0xff] %vm58, 0.0
      %61 = vst.msk [vmem:[#allocation5] sm:$0xff] %vm58, 0.0
    $region33: #{tpu_custom_call.1} parent=1 // pred_fallthru
      _
    %s62 = smul.u32 0, 8
    %s63 = scalar_lea.vmem [#allocation8], %s62
    %v64 = vld [vmem:[%s63] sm:$0xff]
    %s65 = scalar_lea.vmem %s3, %s62
    %v66 = vld [vmem:[%s65] sm:$0xff]
    %v67 = vld [vmem:[#allocation6] sm:$0xff]
    %68 = vmatprep.subr.mxu0 0.0
    %69 = vmatpush1.xpose.msra.mxu0 %v64
    %70 = vmatprep.subr.mxu0 0.0
    %71 = vmatpush1.xpose.msra.mxu0 0.0
    %72 = vmatprep.subr.mxu0 0.0
    %73 = vmatpush1.xpose.msra.mxu0 0.0
    %74 = vmatprep.subr.mxu0 0.0
    %75 = vmatpush1.xpose.msra.mxu0 0.0
    %76 = vmatprep.subr.mxu0 0.0
    %77 = vmatpush1.xpose.msra.mxu0 0.0
    %78 = vmatprep.subr.mxu0 0.0
    %79 = vmatpush1.xpose.msra.mxu0 0.0
    %80 = vmatprep.subr.mxu0 0.0
    %81 = vmatpush1.xpose.msra.mxu0 0.0
    %82 = vmatprep.subr.mxu0 0.0
    %83 = vmatpush1.xpose.msra.mxu0 0.0
    %84 = vmatprep.subr.mxu0 0.0
    %85 = vmatpush1.xpose.msra.mxu0 0.0
    %86 = vmatprep.subr.mxu0 0.0
    %87 = vmatpush1.xpose.msra.mxu0 0.0
    %88 = vmatprep.subr.mxu0 0.0
    %89 = vmatpush1.xpose.msra.mxu0 0.0
    %90 = vmatprep.subr.mxu0 0.0
    %91 = vmatpush1.xpose.msra.mxu0 0.0
    %92 = vmatprep.subr.mxu0 0.0
    %93 = vmatpush1.xpose.msra.mxu0 0.0
    %94 = vmatprep.subr.mxu0 0.0
    %95 = vmatpush1.xpose.msra.mxu0 0.0
    %96 = vmatprep.subr.mxu0 0.0
    %97 = vmatpush1.xpose.msra.mxu0 0.0
    %98 = vmatprep.subr.mxu0 0.0
    %99 = vmatpush1.xpose.msra.mxu0 0.0
    %100 = vmatprep.subr.mxu0 0.0
    %101 = vmatpush1.xpose.msra.mxu0 0.0
    %102 = vmatprep.subr.mxu0 0.0
    %103 = vmatpush1.xpose.msra.mxu0 0.0
    %104 = vmatprep.subr.mxu0 0.0
    %105 = vmatpush1.xpose.msra.mxu0 0.0
    %106 = vmatprep.subr.mxu0 0.0
    %107 = vmatpush1.xpose.msra.mxu0 0.0
    %108 = vmatprep.subr.mxu0 0.0
    %109 = vmatpush1.xpose.msra.mxu0 0.0
    %110 = vmatprep.subr.mxu0 0.0
    %111 = vmatpush1.xpose.msra.mxu0 0.0
    %112 = vmatprep.subr.mxu0 0.0
    %113 = vmatpush1.xpose.msra.mxu0 0.0
    %114 = vmatprep.subr.mxu0 0.0
    %115 = vmatpush1.xpose.msra.mxu0 0.0
    %116 = vmatprep.subr.mxu0 0.0
    %117 = vmatpush1.xpose.msra.mxu0 0.0
    %118 = vmatprep.subr.mxu0 0.0
    %119 = vmatpush1.xpose.msra.mxu0 0.0
    %120 = vmatprep.subr.mxu0 0.0
    %121 = vmatpush1.xpose.msra.mxu0 0.0
    %122 = vmatprep.subr.mxu0 0.0
    %123 = vmatpush1.xpose.msra.mxu0 0.0
    %124 = vmatprep.subr.mxu0 0.0
    %125 = vmatpush1.xpose.msra.mxu0 0.0
    %126 = vmatprep.subr.mxu0 0.0
    %127 = vmatpush1.xpose.msra.mxu0 0.0
    %128 = vmatprep.subr.mxu0 0.0
    %129 = vmatpush1.xpose.msra.mxu0 0.0
    %130 = vmatprep.subr.mxu0 0.0
    %131 = vmatpush1.xpose.msra.mxu0 0.0
    %132 = vmatprep.mubr.f32.mxu0 0.0
    %133 = vmatmul.mubr.f32.gmra.mrb[0].mxu0 %v67
    %v134 = vpop.f32.mrb[0].mxu0
    %v135 = vadd.f32 0.0, %v134
    %v136 = vpop.f32.mrb[0].mxu0
    %137 = vdwg.mxu0
    %v138 = vmul.f32 %v135, 14.285714
    %v139 = vld [vmem:[#allocation10] sm:$0xff]
    %140 = vmatprep.subr.mxu0 0.0
    %141 = vmatpush1.xpose.msra.mxu0 %v66
    %142 = vmatprep.subr.mxu0 0.0
    %143 = vmatpush1.xpose.msra.mxu0 0.0
    %144 = vmatprep.subr.mxu0 0.0
    %145 = vmatpush1.xpose.msra.mxu0 0.0
    %146 = vmatprep.subr.mxu0 0.0
    %147 = vmatpush1.xpose.msra.mxu0 0.0
    %148 = vmatprep.subr.mxu0 0.0
    %149 = vmatpush1.xpose.msra.mxu0 0.0
    %150 = vmatprep.subr.mxu0 0.0
    %151 = vmatpush1.xpose.msra.mxu0 0.0
    %152 = vmatprep.subr.mxu0 0.0
    %153 = vmatpush1.xpose.msra.mxu0 0.0
    %154 = vmatprep.subr.mxu0 0.0
    %155 = vmatpush1.xpose.msra.mxu0 0.0
    %156 = vmatprep.subr.mxu0 0.0
    %157 = vmatpush1.xpose.msra.mxu0 0.0
    %158 = vmatprep.subr.mxu0 0.0
    %159 = vmatpush1.xpose.msra.mxu0 0.0
    %160 = vmatprep.subr.mxu0 0.0
    %161 = vmatpush1.xpose.msra.mxu0 0.0
    %162 = vmatprep.subr.mxu0 0.0
    %163 = vmatpush1.xpose.msra.mxu0 0.0
    %164 = vmatprep.subr.mxu0 0.0
    %165 = vmatpush1.xpose.msra.mxu0 0.0
    %166 = vmatprep.subr.mxu0 0.0
    %167 = vmatpush1.xpose.msra.mxu0 0.0
    %168 = vmatprep.subr.mxu0 0.0
    %169 = vmatpush1.xpose.msra.mxu0 0.0
    %170 = vmatprep.subr.mxu0 0.0
    %171 = vmatpush1.xpose.msra.mxu0 0.0
    %172 = vmatprep.subr.mxu0 0.0
    %173 = vmatpush1.xpose.msra.mxu0 0.0
    %174 = vmatprep.subr.mxu0 0.0
    %175 = vmatpush1.xpose.msra.mxu0 0.0
    %176 = vmatprep.subr.mxu0 0.0
    %177 = vmatpush1.xpose.msra.mxu0 0.0
    %178 = vmatprep.subr.mxu0 0.0
    %179 = vmatpush1.xpose.msra.mxu0 0.0
    %180 = vmatprep.subr.mxu0 0.0
    %181 = vmatpush1.xpose.msra.mxu0 0.0
    %182 = vmatprep.subr.mxu0 0.0
    %183 = vmatpush1.xpose.msra.mxu0 0.0
    %184 = vmatprep.subr.mxu0 0.0
    %185 = vmatpush1.xpose.msra.mxu0 0.0
    %186 = vmatprep.subr.mxu0 0.0
    %187 = vmatpush1.xpose.msra.mxu0 0.0
    %188 = vmatprep.subr.mxu0 0.0
    %189 = vmatpush1.xpose.msra.mxu0 0.0
    %190 = vmatprep.subr.mxu0 0.0
    %191 = vmatpush1.xpose.msra.mxu0 0.0
    %192 = vmatprep.subr.mxu0 0.0
    %193 = vmatpush1.xpose.msra.mxu0 0.0
    %194 = vmatprep.subr.mxu0 0.0
    %195 = vmatpush1.xpose.msra.mxu0 0.0
    %196 = vmatprep.subr.mxu0 0.0
    %197 = vmatpush1.xpose.msra.mxu0 0.0
    %198 = vmatprep.subr.mxu0 0.0
    %199 = vmatpush1.xpose.msra.mxu0 0.0
    %200 = vmatprep.subr.mxu0 0.0
    %201 = vmatpush1.xpose.msra.mxu0 0.0
    %202 = vmatprep.subr.mxu0 0.0
    %203 = vmatpush1.xpose.msra.mxu0 0.0
    %204 = vmatprep.mubr.f32.mxu0 0.0
    %205 = vmatmul.mubr.f32.gmra.mrb[0].mxu0 %v139
    %v206 = vpop.f32.mrb[0].mxu0
    %v207 = vadd.f32 0.0, %v206
    %v208 = vpop.f32.mrb[0].mxu0
    %209 = vdwg.mxu0
    %s210 = smul.u32 0, 8
    %v211 = vlaneseq
    %v212 = vshrl.u32 %v211, 7
    %v213 = vstv %s210
    %v214 = vadd.s32 %v213, %v212
    %v215 = vlaneseq
    %v216 = vand.u32 %v215, 127
    %v217 = vstv %s62
    %v218 = vadd.s32 %v217, %v216
    %vm219 = vcmp.ne.s32.totalorder %v214, %v218
    %v220 = vld [vmem:[#allocation2] sm:$0xff]
    %vm221 = vcmask 64512
    %v222 = vsel %vm221, %v138, -inf
    %223 = vmax.xlane.f32.xlu0 %v222
    %v224 = vpop.xlane.xlu0 %223
    %v225 = vmax.f32 %v220, %v224
    %227 = vset.pattern.permute.xlu0 0
    %228 = vperm.xlu0 %227, %v225
    %v229 = vpop.permute.xlu0 %228
    %v231 = vsub.f32 %v138, %v229
    %v232 = vmul.f32 %v231, 1.442695
    %v233 = vpow.pop %v232
    %v234 = vsel %vm219, %v233, 0.0
    %v235 = vld [vmem:[#allocation3] sm:$0xff]
    %v236 = vsub.f32 %v220, %v225
    %v237 = vmul.f32 %v236, 1.442695
    %v238 = vpow.pop %v237
    %240 = vset.pattern.permute.xlu0 0
    %241 = vperm.xlu0 %240, %v238
    %v242 = vpop.permute.xlu0 %241
    %v244 = vmul.f32 %v235, %v242
    %v245 = vadd.f32 %v244, %v234
    %246 = vst.msk [vmem:[#allocation3] sm:$0xff] %vm221, %v245
    %vm247 = vcmask 7168
    %248 = vst.msk [vmem:[#allocation2] sm:$0xff] %vm247, %v225
    %vm249 = vcmp.gt.f32.partialorder %v207, 0.0
    %vm250 = vmand %vm249, %vm219
    %v251 = vld [vmem:[#allocation4] sm:$0xff]
    %v252 = vsel %vm250, %v138, 0.0
    %v253 = vadd.f32 %v251, %v252
    %254 = vst.msk [vmem:[#allocation4] sm:$0xff] %vm221, %v253
    %v255 = vld [vmem:[#allocation5] sm:$0xff]
    %v256 = vsel %vm250, 1.0, 0.0
    %v257 = vadd.f32 %v255, %v256
    %258 = vst.msk [vmem:[#allocation5] sm:$0xff] %vm221, %v257
    // Predicated region
    $region34: #{tpu_custom_call.1} parent=1 // pred_check
      %p259 = pneg %p52
    $region35: #{tpu_custom_call.1} parent=1 // pred_check_branch
      %261 = sbr.rel (%p259) target = $region37
    $region36: #{tpu_custom_call.1} parent=1 // pred_region
      %v262 = vld [vmem:[#allocation3] sm:$0xff]
      %v263 = vsel %vm221, %v262, 0.0
      %264 = vadd.xlane.f32.xlu0 %v263
      %v265 = vpop.xlane.xlu0 %264
      %v266 = vld [vmem:[#allocation4] sm:$0xff]
      %v267 = vsel %vm221, %v266, 0.0
      %268 = vadd.xlane.f32.xlu0 %v267
      %v269 = vpop.xlane.xlu0 %268
      %v270 = vld [vmem:[#allocation5] sm:$0xff]
      %v271 = vsel %vm221, %v270, 0.0
      %272 = vadd.xlane.f32.xlu0 %v271
      %v273 = vpop.xlane.xlu0 %272
      %v274 = vld [vmem:[#allocation2] sm:$0xff]
      %v275 = vadd.f32 %v265, 1e-12
      %v276 = vlog2.pop %v275
      %v277 = vmul.f32 %v276, 0.6931472
      %v278 = vadd.f32 %v274, %v277
      %v279 = vmul.f32 %v273, %v278
      %v280 = vsub.f32 %v269, %v279
      %v281 = vadd.f32 %v273, 1e-12
      %v282 = vrcp.pop %v281
      %v283 = vmul.f32 %v280, %v282
      %284 = vst.msk [vmem:[%s4] sm:$0xff] %vm247, %v283
    $region37: #{tpu_custom_call.1} parent=1 // pred_fallthru
      _
    // Predicated region
    $region38: #{tpu_custom_call.1} parent=1 // pred_check
      _
    $region39: #{tpu_custom_call.1} parent=1 // pred_check_branch
      %286 = sbr.rel (0) target = $region41
    $region40: #{tpu_custom_call.1} parent=1 // pred_region
      _
    $region41: #{tpu_custom_call.1} parent=1 // pred_fallthru
      _
    // Predicated region
    $region42: #{tpu_custom_call.1} parent=1 // pred_check
      _
    $region43: #{tpu_custom_call.1} parent=1 // pred_check_branch
      %288 = sbr.rel (0) target = $region45
    $region44: #{tpu_custom_call.1} parent=1 // pred_region
      _
    $region45: #{tpu_custom_call.1} parent=1 // pred_fallthru
      _
    %289 = vsyncpa [#allocation7], 1
    %290 = vsyncpa [#allocation9], 1

</llo_original>
